<compile_context>
chip_gen: v7x
topology: tpu7x:2x2x1
jax: 0.10.0
libtpu: 0.0.40
codegen_flags: <defaults>
</compile_context>

<pallas_src>
import math

import jax
import jax.numpy as jnp
from jax.experimental import pallas as pl
from jax.experimental.pallas import tpu as pltpu


def make_positional_encoding(d_model: int, max_len: int = 2048) -> jnp.ndarray:
    """Deterministic sinusoidal table, shape (max_len, d_model), float32."""
    assert d_model % 2 == 0, "d_model must be even (same constraint as the PyTorch module)"
    position = jnp.arange(0, max_len, dtype=jnp.float32)[:, None]            # (L, 1)
    div_term = jnp.exp(
        jnp.arange(0, d_model, 2, dtype=jnp.float32)
        * (-math.log(10000.0) / d_model)
    )                                                                         # (D/2,)
    angles = position * div_term                                              # (L, D/2)
    pe = jnp.zeros((max_len, d_model), dtype=jnp.float32)
    pe = pe.at[:, 0::2].set(jnp.sin(angles))
    pe = pe.at[:, 1::2].set(jnp.cos(angles))
    return pe                                                                 # (L, D)


def _pe_add_kernel(x_ref, pe_ref, o_ref):
    # x_ref / o_ref: (1, TR, C) tile of one batch row; pe_ref: (TR, C) shared table tile.
    # Explicit cast so bf16 activations never rely on an implicit mixed-dtype store.
    o_ref[...] = (x_ref[...] + pe_ref[...]).astype(o_ref.dtype)


def _lane_dense_fold(seq_len: int, d_model: int) -> tuple[int, int]:
    """Fold the per-batch (S, D) slab into (R, C) with C a multiple of 128 when
    possible, so output stores are unmasked (lane-dense).  A row-major reshape
    keeps the broadcasted elementwise add exact."""
    if d_model % 128 == 0:
        return seq_len, d_model
    total = seq_len * d_model
    for cand in (1024, 512, 256, 128):
        if total % cand == 0:
            return total // cand, cand
    return seq_len, d_model  # fallback: masked stores, still correct


def _choose_row_tile(num_rows: int, num_cols: int, itemsize: int,
                     max_tile_bytes: int = 2 << 20) -> int:
    """Rows per tile: big enough to amortize per-grid-step overhead (aim for
    hundreds of sublane rows), small enough that ~6 double-buffered copies
    (2x x, 2x pe, 2x out) stay well inside scoped VMEM on every generation
    (v7x has only 64 MiB physical / 32 MiB default scoped; v5e 16 MiB scoped)."""
    rows_budget = max(8, max_tile_bytes // max(1, num_cols * itemsize))
    tr = min(num_rows, 1024, rows_budget)
    if tr < num_rows:
        # Second-to-last block dim must be a multiple of 8 unless it equals the full dim.
        tr = max(8, (tr // 8) * 8)
    return tr


def positional_encoding_forward(x: jnp.ndarray, pe: jnp.ndarray,
                                *, donate_x: bool = False) -> jnp.ndarray:
    """x: (B, S, D), pe: (max_len, D).  Returns x + pe[None, :S, :]."""
    B, S, D = x.shape
    # Keep pe in the activation dtype: no mixed-dtype promotion inside the
    # kernel, and half the pe DMA traffic when x is bf16.  (Math stays in the
    # activation dtype; this kernel is DMA-bound on all generations.)
    pe_slice = pe[:S, :].astype(x.dtype)                  # (S, D) — static slice, plain-JAX glue

    R, C = _lane_dense_fold(S, D)
    x2 = x.reshape(B, R, C)
    pe2 = pe_slice.reshape(R, C)

    itemsize = jnp.dtype(x.dtype).itemsize
    TR = _choose_row_tile(R, C, itemsize)
    n_row_tiles = pl.cdiv(R, TR)

    out2 = pl.pallas_call(
        _pe_add_kernel,
        out_shape=jax.ShapeDtypeStruct((B, R, C), x.dtype),
        # Grid order (row_tiles, B): pe's block index depends only on the slow
        # axis, so consecutive steps over B reuse the resident pe tile.
        grid=(n_row_tiles, B),
        in_specs=[
            pl.BlockSpec((1, TR, C), lambda r, b: (b, r, 0)),   # x: one row tile of one batch element
            pl.BlockSpec((TR, C),    lambda r, b: (r, 0)),      # pe: batch-invariant shared tile
        ],
        out_specs=pl.BlockSpec((1, TR, C), lambda r, b: (b, r, 0)),
        compiler_params=pltpu.CompilerParams(
            # Every output block is written exactly once -> both axes parallel
            # (sharded across the two TensorCores on v7x; neutral on v5e/v6e).
            dimension_semantics=("parallel", "parallel"),
        ),
        # In-place add (saves one B*S*D HBM allocation) only pays off when the
        # caller actually donates x; otherwise XLA would insert a defensive
        # copy.  Off by default so callers can keep using x afterwards.
        input_output_aliases=({0: 0} if donate_x else {}),
    )(x2, pe2)

    return out2.reshape(B, S, D)


if __name__ == "__main__":
    # Small shapes consistent with the module's forward: (batch, seq, d_model)
    B, S, D = 2, 8, 32
    MAX_LEN = 2048

    key = jax.random.PRNGKey(0)
    x = jax.random.normal(key, (B, S, D), dtype=jnp.float32)

    pe = make_positional_encoding(D, MAX_LEN)

    out = jax.jit(positional_encoding_forward)(x, pe)
    out = jax.block_until_ready(out)

    # Correctness check against plain-JAX reference of the PyTorch forward.
    ref = x + pe[None, :S, :]
    assert out.shape == (B, S, D)
    assert jnp.allclose(out, ref, atol=1e-6), "mismatch vs reference"

    print("KERNEL_OK")
</pallas_src>

<mosaic_0001>
module attributes {stable_mosaic.version = 11 : i64} {
  func.func @_pe_add_kernel(%arg0: i32, %arg1: i32, %arg2: memref<1x1x256xf32, #tpu.memory_space<vmem>>, %arg3: memref<1x256xf32, #tpu.memory_space<vmem>>, %arg4: memref<1x1x256xf32, #tpu.memory_space<vmem>>) attributes {dimension_semantics = [#tpu.dimension_semantics<parallel>, #tpu.dimension_semantics<parallel>], iteration_bounds = array<i64: 1, 2>, scalar_prefetch = 0 : i64, scratch_operands = 0 : i64, tpu.core_type = #tpu.core_type<tc>, window_params = [{transform_indices = @transform_0, window_bounds = array<i64: 1, 1, 256>}, {transform_indices = @transform_1, window_bounds = array<i64: 1, 256>}, {transform_indices = @transform_2, window_bounds = array<i64: 1, 1, 256>}]} {
    %c0 = arith.constant 0 : index
    %c0_0 = arith.constant 0 : index
    %c0_1 = arith.constant 0 : index
    %0 = vector.load %arg2[%c0, %c0_0, %c0_1] : memref<1x1x256xf32, #tpu.memory_space<vmem>>, vector<1x1x256xf32>
    %c0_2 = arith.constant 0 : index
    %c0_3 = arith.constant 0 : index
    %1 = vector.load %arg3[%c0_2, %c0_3] : memref<1x256xf32, #tpu.memory_space<vmem>>, vector<1x256xf32>
    %2 = vector.shape_cast %1 : vector<1x256xf32> to vector<1x1x256xf32>
    %3 = arith.addf %0, %2 : vector<1x1x256xf32>
    %c0_4 = arith.constant 0 : index
    %c0_5 = arith.constant 0 : index
    %c0_6 = arith.constant 0 : index
    %4 = vector.load %arg4[%c0_4, %c0_5, %c0_6] : memref<1x1x256xf32, #tpu.memory_space<vmem>>, vector<1x1x256xf32>
    tpu.vector_store %arg4[%c0_4, %c0_5, %c0_6], %3 {strides = array<i32>} : memref<1x1x256xf32, #tpu.memory_space<vmem>>, vector<1x1x256xf32>,
    return
  }
  func.func @transform_0(%arg0: i32, %arg1: i32) -> (i32, i32, i32) {
    %c0_i32 = arith.constant 0 : i32
    %c0_i32_0 = arith.constant 0 : i32
    return %arg1, %arg0, %c0_i32 : i32, i32, i32
  }
  func.func @transform_1(%arg0: i32, %arg1: i32) -> (i32, i32) {
    %c0_i32 = arith.constant 0 : i32
    %c0_i32_0 = arith.constant 0 : i32
    return %arg0, %c0_i32 : i32, i32
  }
  func.func @transform_2(%arg0: i32, %arg1: i32) -> (i32, i32, i32) {
    %c0_i32 = arith.constant 0 : i32
    %c0_i32_0 = arith.constant 0 : i32
    return %arg1, %arg0, %c0_i32 : i32, i32, i32
  }
}

</mosaic_0001>

<llo_original>
// kernel: positional_encoding_forward.1
$region0: #{positional_encoding_forward.1}
  #allocation0 [shape = 'u32[]', space=smem, size = 0x4, offset = 0x4, fixed_abs, tag = 'smem constant byte address 0x4 - core index']
  #allocation1 [shape = 'u32[144,128]{1,0:T(1,128)}', space=vmem, size = 0x12000, scoped, tag = 'internal scratch']
  %s0 = inlined_call_operand.vmem [shape: f32[2,1,256], index: 0, kind: input, shape index: {}]
  %s1 = inlined_call_operand.vmem [shape: f32[1,256], index: 1, kind: input, shape index: {}]
  %s2 = inlined_call_operand.vmem [shape: f32[2,1,256], index: 2, kind: output, shape index: {}]
  %s3 = sld [smem:[#allocation0]]
  $region41: #{positional_encoding_forward.1} parent=0
    _
  %s5 = ssub.s32 1, %s3
  %s6 = scalar_select 0, %s5, %s3
  loop: start=0, step=1, limit=4
  $region2: #{positional_encoding_forward.1} parent=0 // loop_pre_header
    _
  $region3: #{positional_encoding_forward.1} parent=0 // loop_header
    %s8 = sphi 0, %s12
    %p9 = scmp.ge.s32.totalorder %s8, 4
    %s15 = sphi 0, %s27
    %s16 = sphi 0, %s23
    %s17 = sphi 0, %s15
    %s18 = sphi 0, %s16
    %s19 = sphi 0, %s17
    %s20 = sphi 0, %s18
    %s32 = sphi 0, %s34
    %s35 = sphi 0, %s32
    %s36 = sphi 0, %s35
    %s52 = sphi 0, %s36
    %s58 = sphi 0, %s60
    %s61 = sphi 0, %s58
    %s62 = sphi 0, %s61
    %s78 = sphi 0, %s62
    %s86 = sphi 0, %s88
    %s89 = sphi 0, %s86
    %s90 = sphi 0, %s89
    %s106 = sphi 0, %s90
  $region4: #{positional_encoding_forward.1} parent=0 // loop_header_branch
    %11 = sbr.rel (%p9) target = $region8
  $region5: #{positional_encoding_forward.1} parent=0 // loop_body
    %s13 = ssub.s32 %s8, 1
    %s14 = ssub.s32 %s8, 2
    %s21 = sadd.s32 1, %s16
    %p22 = scmp.ge.s32.totalorder %s21, 2
    %s23 = scalar_select %p22, 0, %s21
    %s24 = sadd.s32 1, %s15
    %s25 = scalar_select %p22, %s24, %s15
    %p26 = scmp.ge.s32.totalorder %s25, 1
    %s27 = scalar_select %p26, 0, %s25
    %s28 = ssub.s32 %s16, %s23
    %s29 = ssub.s32 %s15, %s27
    %s30 = sor.u32 %s28, %s29
    %p31 = scmp.eq.s32.totalorder %s30, 0
    %s33 = sadd.s32 %s32, 1
    %s34 = scalar_select %p31, %s32, %s33
    %p37 = pneg %p31
    %p38 = scmp.eq.s32.totalorder %s8, 1
    %p39 = por %p37, %p38
    %p40 = scmp.ne.s32.totalorder %s32, %s35
    %p41 = scmp.eq.s32.totalorder %s8, 0
    %p42 = por %p40, %p41
    %p43 = scmp.ne.s32.totalorder %s32, %s35
    %p44 = scmp.eq.s32.totalorder %s13, 1
    %p45 = por %p43, %p44
    %p46 = scmp.ne.s32.totalorder %s35, %s36
    %p47 = scmp.eq.s32.totalorder %s13, 0
    %p48 = por %p46, %p47
    %p49 = scmp.ne.s32.totalorder %s35, %s36
    %p50 = scmp.eq.s32.totalorder %s14, 1
    %p51 = por %p49, %p50
    %p53 = scmp.ne.s32.totalorder %s36, %s52
    %p54 = scmp.eq.s32.totalorder %s14, 0
    %p55 = por %p53, %p54
    %s56 = ssub.s32 %s15, %s27
    %p57 = scmp.eq.s32.totalorder %s56, 0
    %s59 = sadd.s32 %s58, 1
    %s60 = scalar_select %p57, %s58, %s59
    %p63 = pneg %p57
    %p64 = scmp.eq.s32.totalorder %s8, 1
    %p65 = por %p63, %p64
    %p66 = scmp.ne.s32.totalorder %s58, %s61
    %p67 = scmp.eq.s32.totalorder %s8, 0
    %p68 = por %p66, %p67
    %p69 = scmp.ne.s32.totalorder %s58, %s61
    %p70 = scmp.eq.s32.totalorder %s13, 1
    %p71 = por %p69, %p70
    %p72 = scmp.ne.s32.totalorder %s61, %s62
    %p73 = scmp.eq.s32.totalorder %s13, 0
    %p74 = por %p72, %p73
    %p75 = scmp.ne.s32.totalorder %s61, %s62
    %p76 = scmp.eq.s32.totalorder %s14, 1
    %p77 = por %p75, %p76
    %p79 = scmp.ne.s32.totalorder %s62, %s78
    %p80 = scmp.eq.s32.totalorder %s14, 0
    %p81 = por %p79, %p80
    %s82 = ssub.s32 %s16, %s23
    %s83 = ssub.s32 %s15, %s27
    %s84 = sor.u32 %s82, %s83
    %p85 = scmp.eq.s32.totalorder %s84, 0
    %s87 = sadd.s32 %s86, 1
    %s88 = scalar_select %p85, %s86, %s87
    %p91 = pneg %p85
    %p92 = scmp.eq.s32.totalorder %s8, 1
    %p93 = por %p91, %p92
    %p94 = scmp.ne.s32.totalorder %s86, %s89
    %p95 = scmp.eq.s32.totalorder %s8, 0
    %p96 = por %p94, %p95
    %p97 = scmp.ne.s32.totalorder %s86, %s89
    %p98 = scmp.eq.s32.totalorder %s13, 1
    %p99 = por %p97, %p98
    %p100 = scmp.ne.s32.totalorder %s89, %s90
    %p101 = scmp.eq.s32.totalorder %s13, 0
    %p102 = por %p100, %p101
    %p103 = scmp.ne.s32.totalorder %s89, %s90
    %p104 = scmp.eq.s32.totalorder %s14, 1
    %p105 = por %p103, %p104
    %p107 = scmp.ne.s32.totalorder %s90, %s106
    %p108 = scmp.eq.s32.totalorder %s14, 0
    %p109 = por %p107, %p108
    %p110 = scmp.le.s32.totalorder 1, %s8
    %p111 = scmp.lt.s32.totalorder %s8, 3
    %p112 = pnand %p110, %p111
    %p113 = pneg %p112
    // Predicated region
    $region9: #{positional_encoding_forward.1} parent=5 // pred_check
      _
    $region10: #{positional_encoding_forward.1} parent=5 // pred_check_branch
      %115 = sbr.rel (%p112) target = $region12
    $region11: #{positional_encoding_forward.1} parent=5 // pred_region
      %s116 = ssub.s32 %s8, 1
      // Predicated region
      $region13: #{positional_encoding_forward.1} parent=11 // pred_check
        %p117 = pneg %p74
      $region14: #{positional_encoding_forward.1} parent=11 // pred_check_branch
        %119 = sbr.rel (%p117) target = $region16
      $region15: #{positional_encoding_forward.1} parent=11 // pred_region
        %p120 = scmp.lt.s32.totalorder %s17, 0
        %s121 = scalar_select %p120, %s17, 0
        %s122 = smul.addr %s121, 2
        %s123 = scalar_lea.vmem %s1, %s122
      $region16: #{positional_encoding_forward.1} parent=11 // pred_fallthru
        _
    $region12: #{positional_encoding_forward.1} parent=5 // pred_fallthru
      _
    %p124 = scmp.lt.s32.totalorder %s8, 2
    // Predicated region
    $region17: #{positional_encoding_forward.1} parent=5 // pred_check
      %p125 = pneg %p124
    $region18: #{positional_encoding_forward.1} parent=5 // pred_check_branch
      %127 = sbr.rel (%p125) target = $region20
    $region19: #{positional_encoding_forward.1} parent=5 // pred_region
      // Predicated region
      $region21: #{positional_encoding_forward.1} parent=19 // pred_check
        %p128 = pneg %p42
      $region22: #{positional_encoding_forward.1} parent=19 // pred_check_branch
        %130 = sbr.rel (%p128) target = $region24
      $region23: #{positional_encoding_forward.1} parent=19 // pred_region
        %p131 = scmp.lt.s32.totalorder %s16, 1
        %s132 = scalar_select %p131, %s16, 1
        %p133 = scmp.lt.s32.totalorder %s15, 0
        %s134 = scalar_select %p133, %s15, 0
        %s135 = smul.addr %s134, 2
        %s136 = smul.addr %s132, 2
        %s137 = sadd.s32 %s135, %s136
        %s138 = scalar_lea.vmem %s0, %s137
      $region24: #{positional_encoding_forward.1} parent=19 // pred_fallthru
        _
    $region20: #{positional_encoding_forward.1} parent=5 // pred_fallthru
      _
    %p139 = scmp.le.s32.totalorder 1, %s8
    %p140 = scmp.lt.s32.totalorder %s8, 3
    %p141 = pnand %p139, %p140
    %p142 = pneg %p141
    // Predicated region
    $region25: #{positional_encoding_forward.1} parent=5 // pred_check
      _
    $region26: #{positional_encoding_forward.1} parent=5 // pred_check_branch
      %144 = sbr.rel (%p141) target = $region28
    $region27: #{positional_encoding_forward.1} parent=5 // pred_region
      %s145 = ssub.s32 %s8, 1
      %p146 = scmp.lt.s32.totalorder %s18, 1
      %s147 = scalar_select %p146, %s18, 1
      %p148 = scmp.lt.s32.totalorder %s17, 0
      %s149 = scalar_select %p148, %s17, 0
      %s150 = smul.addr %s149, 2
      %s151 = smul.addr %s147, 2
      %s152 = sadd.s32 %s150, %s151
      %s153 = scalar_lea.vmem %s0, %s152
      %p154 = pneg %p48
      %p155 = pneg %p45
      %p156 = scmp.lt.s32.totalorder %s17, 0
      %s157 = scalar_select %p156, %s17, 0
      %s158 = smul.addr %s157, 2
      %s159 = scalar_lea.vmem %s1, %s158
      %p160 = pneg %p74
      %p161 = pneg %p71
      %p162 = pneg %p102
      %p163 = pneg %p99
      %p164 = scmp.lt.s32.totalorder %s18, 1
      %s165 = scalar_select %p164, %s18, 1
      %p166 = scmp.lt.s32.totalorder %s17, 0
      %s167 = scalar_select %p166, %s17, 0
      %s168 = smul.addr %s167, 2
      %s169 = smul.addr %s165, 2
      %s170 = sadd.s32 %s168, %s169
      %s171 = scalar_lea.vmem %s2, %s170
      %p172 = scmp.lt.s32.totalorder %s18, 1
      %s173 = scalar_select %p172, %s18, 1
      %p174 = scmp.lt.s32.totalorder %s17, 0
      %s175 = scalar_select %p174, %s17, 0
      %s176 = smul.addr %s175, 2
      %s177 = smul.addr %s173, 2
      %s178 = sadd.s32 %s176, %s177
      %s179 = scalar_lea.vmem %s0, %s178
      %p180 = scmp.lt.s32.totalorder %s17, 0
      %s181 = scalar_select %p180, %s17, 0
      %s182 = smul.addr %s181, 2
      %s183 = scalar_lea.vmem %s1, %s182
      %p184 = scmp.lt.s32.totalorder %s18, 1
      %s185 = scalar_select %p184, %s18, 1
      %p186 = scmp.lt.s32.totalorder %s17, 0
      %s187 = scalar_select %p186, %s17, 0
      %s188 = smul.addr %s187, 2
      %s189 = smul.addr %s185, 2
      %s190 = sadd.s32 %s188, %s189
      %s191 = scalar_lea.vmem %s2, %s190
      %v192 = vld [vmem:[%s179] sm:$0x3]
      %v193 = vld [vmem:[%s183] sm:$0x3]
      %v194 = vadd.f32 %v192, %v193
      %v195 = vlaneseq
      %vm196 = vcmp.ge.s32.totalorder %v195, 0
      %vm197 = vcmp.lt.s32.totalorder %v195, 256
      %vm198 = vmand %vm196, %vm197
      %199 = vst.msk [vmem:[%s191] sm:$0x3] %vm198, %v194
      %p200 = scmp.lt.s32.totalorder %s18, 1
      %s201 = scalar_select %p200, %s18, 1
      %p202 = scmp.lt.s32.totalorder %s17, 0
      %s203 = scalar_select %p202, %s17, 0
      %s204 = smul.addr %s203, 2
      %s205 = smul.addr %s201, 2
      %s206 = sadd.s32 %s204, %s205
      %s207 = scalar_lea.vmem %s2, %s206
      // Predicated region
      $region29: #{positional_encoding_forward.1} parent=27 // pred_check
        %p208 = pneg %p99
      $region30: #{positional_encoding_forward.1} parent=27 // pred_check_branch
        %210 = sbr.rel (%p208) target = $region32
      $region31: #{positional_encoding_forward.1} parent=27 // pred_region
        _
      $region32: #{positional_encoding_forward.1} parent=27 // pred_fallthru
        _
    $region28: #{positional_encoding_forward.1} parent=5 // pred_fallthru
      _
    %p211 = scmp.le.s32.totalorder 2, %s8
    // Predicated region
    $region33: #{positional_encoding_forward.1} parent=5 // pred_check
      %p212 = pneg %p211
    $region34: #{positional_encoding_forward.1} parent=5 // pred_check_branch
      %214 = sbr.rel (%p212) target = $region36
    $region35: #{positional_encoding_forward.1} parent=5 // pred_region
      %s215 = ssub.s32 %s8, 2
      // Predicated region
      $region37: #{positional_encoding_forward.1} parent=35 // pred_check
        %p216 = pneg %p105
      $region38: #{positional_encoding_forward.1} parent=35 // pred_check_branch
        %218 = sbr.rel (%p216) target = $region40
      $region39: #{positional_encoding_forward.1} parent=35 // pred_region
        %p219 = scmp.lt.s32.totalorder %s20, 1
        %s220 = scalar_select %p219, %s20, 1
        %p221 = scmp.lt.s32.totalorder %s19, 0
        %s222 = scalar_select %p221, %s19, 0
        %s223 = smul.addr %s222, 2
        %s224 = smul.addr %s220, 2
        %s225 = sadd.s32 %s223, %s224
        %s226 = scalar_lea.vmem %s2, %s225
      $region40: #{positional_encoding_forward.1} parent=35 // pred_fallthru
        _
    $region36: #{positional_encoding_forward.1} parent=5 // pred_fallthru
      _
  $region6: #{positional_encoding_forward.1} parent=0 // loop_footer
    %s12 = sadd.s32 1, %s8
  $region7: #{positional_encoding_forward.1} parent=0 // loop_footer_branch
    %7 = sbr.rel target = $region3
  $region8: #{positional_encoding_forward.1} parent=0 // loop_exit
    _

</llo_original>
